<compile_context>
chip_gen: v5e
topology: v5e:2x2
jax: 0.10.0
libtpu: 0.0.40
codegen_flags: <defaults>
</compile_context>

<pallas_src>
import math
import functools

import jax
import jax.numpy as jnp
from jax.experimental import pallas as pl
from jax.experimental.pallas import tpu as pltpu

_EPS = 1e-5
_NEG_INF = -1e30


def _layernorm_f32(x, w, b):
    mu = jnp.mean(x, axis=-1, keepdims=True)
    var = jnp.mean((x - mu) ** 2, axis=-1, keepdims=True)
    return (x - mu) * jax.lax.rsqrt(var + _EPS) * w + b


def _vmem_capacity_bytes():
    """Physical per-core VMEM; generation-aware, with a safe fallback."""
    try:
        info = pltpu.get_tpu_info()
        cap = int(getattr(info, "vmem_capacity_bytes", 0) or 0)
        if cap > 0:
            return cap
    except Exception:
        pass
    return 128 * 1024 * 1024


def _pick_tile(t, max_tile):
    """Largest MXU-friendly tile <= max_tile that divides T (falls back to full T)."""
    cand = max_tile
    while cand >= 128:
        if t % cand == 0:
            return cand
        cand //= 2
    return t


def _const_spec(shape):
    """Full-array BlockSpec with a constant block index.

    Single-buffered (pipeline_mode=pl.Buffered(1)) when supported: the block index
    never changes, so double-buffering only wastes VMEM.
    """
    idx = lambda *_: (0,) * len(shape)
    if hasattr(pl, "Buffered"):
        try:
            return pl.BlockSpec(shape, idx, pipeline_mode=pl.Buffered(1))
        except Exception:
            pass
    return pl.BlockSpec(shape, idx)


# --------------------------------------------------------------------------
# Kernel 1: y = LN1(x); [q|k|v] = y @ W_qkv + b_qkv   (bf16 outputs, f32 accum)
# (the 1/sqrt(hd) attention scale is already folded into the q columns of W/b)
# --------------------------------------------------------------------------
def qkv_kernel(x_ref, ln1_w_ref, ln1_b_ref, wqkv_ref, bqkv_ref,
               q_ref, k_ref, v_ref):
    x = x_ref[...].astype(jnp.float32)                      # (tt, C)
    y = _layernorm_f32(x, ln1_w_ref[...], ln1_b_ref[...])
    yb = y.astype(jnp.bfloat16)
    qkv = jnp.dot(yb, wqkv_ref[...],
                  preferred_element_type=jnp.float32) + bqkv_ref[...]   # (tt, 3C)
    C = q_ref.shape[-1]
    q_ref[...] = qkv[:, :C].astype(q_ref.dtype)
    k_ref[...] = qkv[:, C:2 * C].astype(k_ref.dtype)
    v_ref[...] = qkv[:, 2 * C:].astype(v_ref.dtype)


# --------------------------------------------------------------------------
# Kernel 2: flash attention (online softmax) + proj + residual + LN2 + MLP
# grid = (B, num_q_tiles, num_kv_tiles); kv is the "arbitrary" reduction axis.
# Requires tq == tk; diagonal tile (kv_idx == q_idx) is masked + finalizes.
# --------------------------------------------------------------------------
def attn_mlp_kernel(x_ref, q_ref, k_ref, v_ref,
                    wp_ref, bp_ref, ln2_w_ref, ln2_b_ref,
                    w1_ref, b1_ref, w2_ref, b2_ref,
                    o_ref,
                    acc_ref, m_ref, l_ref,
                    *, n_head, tq, tk):
    q_idx = pl.program_id(1)
    kv_idx = pl.program_id(2)

    C = q_ref.shape[-1]
    hd = C // n_head

    @pl.when(kv_idx == 0)
    def _init():
        acc_ref[...] = jnp.zeros(acc_ref.shape, acc_ref.dtype)
        m_ref[...] = jnp.full(m_ref.shape, _NEG_INF, m_ref.dtype)
        l_ref[...] = jnp.zeros(l_ref.shape, l_ref.dtype)

    def _flash_update(apply_mask):
        q = q_ref[...]                                      # (tq, C) bf16, pre-scaled
        k = k_ref[...]                                      # (tk, C) bf16
        v = v_ref[...]                                      # (tk, C) bf16

        if apply_mask:                                      # diagonal tile only
            row = jax.lax.broadcasted_iota(jnp.int32, (tq, tk), 0) + q_idx * tq
            col = jax.lax.broadcasted_iota(jnp.int32, (tq, tk), 1) + kv_idx * tk
            causal = row >= col

        m_prev = m_ref[...]                                 # (tq, n_head) f32
        l_prev = l_ref[...]

        m_cols, l_cols, alpha_cols, pv_cols = [], [], [], []
        for h in range(n_head):                             # static unrolled head loop
            sl = slice(h * hd, (h + 1) * hd)
            # s = q_h @ k_h^T  (no explicit transpose materialized; scale pre-folded)
            s = jax.lax.dot_general(q[:, sl], k[:, sl], (((1,), (1,)), ((), ())),
                                    preferred_element_type=jnp.float32)
            if apply_mask:
                s = jnp.where(causal, s, _NEG_INF)

            mp = m_prev[:, h:h + 1]                         # (tq, 1)
            lp = l_prev[:, h:h + 1]
            mn = jnp.maximum(mp, jnp.max(s, axis=-1, keepdims=True))
            alpha = jnp.exp(mp - mn)
            p = jnp.exp(s - mn)                             # (tq, tk) f32
            ln_ = alpha * lp + jnp.sum(p, axis=-1, keepdims=True)
            pv = jax.lax.dot_general(p.astype(v.dtype), v[:, sl],
                                     (((1,), (0,)), ((), ())),
                                     preferred_element_type=jnp.float32)  # (tq, hd)
            m_cols.append(mn)
            l_cols.append(ln_)
            alpha_cols.append(jnp.broadcast_to(alpha, (tq, hd)))
            pv_cols.append(pv)

        # One lane-dense store per scratch per kv step (no per-head masked stores).
        m_ref[...] = jnp.concatenate(m_cols, axis=1)
        l_ref[...] = jnp.concatenate(l_cols, axis=1)
        acc_ref[...] = (jnp.concatenate(alpha_cols, axis=1) * acc_ref[...]
                        + jnp.concatenate(pv_cols, axis=1))

    @pl.when(kv_idx < q_idx)                                # interior: no mask needed
    def _interior():
        _flash_update(apply_mask=False)

    @pl.when(kv_idx == q_idx)                               # diagonal tile + epilogue
    def _diag_and_finalize():
        _flash_update(apply_mask=True)

        # normalize accumulator per head (EUP approx reciprocal), single store
        inv_l = pl.reciprocal(l_ref[...], approx=True)      # (tq, n_head)
        inv_full = jnp.concatenate(
            [jnp.broadcast_to(inv_l[:, h:h + 1], (tq, hd)) for h in range(n_head)],
            axis=1)                                         # (tq, C)
        att_out = (acc_ref[...] * inv_full).astype(jnp.bfloat16)

        # output projection + residual
        x = x_ref[...].astype(jnp.float32)                  # (tq, C)
        x1 = x + jnp.dot(att_out, wp_ref[...],
                         preferred_element_type=jnp.float32) + bp_ref[...]

        # LN2 + MLP (GELU exact erf, matching nn.GELU default) + residual
        z = _layernorm_f32(x1, ln2_w_ref[...], ln2_b_ref[...]).astype(jnp.bfloat16)
        hidden = w1_ref.shape[-1]
        chunk = 512 if (hidden > 512 and hidden % 512 == 0) else hidden
        mlp = jnp.zeros_like(x1)
        for h0 in range(0, hidden, chunk):                  # static chunking of 4C
            hs = slice(h0, h0 + chunk)
            h1 = jnp.dot(z, w1_ref[:, hs],
                         preferred_element_type=jnp.float32) + b1_ref[:, hs]
            h1 = jax.nn.gelu(h1, approximate=False)
            mlp = mlp + jnp.dot(h1.astype(jnp.bfloat16), w2_ref[hs, :],
                                preferred_element_type=jnp.float32)

        o_ref[...] = (x1 + mlp + b2_ref[...]).astype(o_ref.dtype)


# --------------------------------------------------------------------------
# Wrapper
# --------------------------------------------------------------------------
def transformer_block(x, params, n_head):
    B, T, C = x.shape
    assert C % n_head == 0
    hd = C // n_head
    scale = 1.0 / math.sqrt(hd)
    f32, bf16 = jnp.float32, jnp.bfloat16

    ln1_w = params['ln1_w'].astype(f32)
    ln1_b = params['ln1_b'].astype(f32)
    ln2_w = params['ln2_w'].astype(f32)
    ln2_b = params['ln2_b'].astype(f32)
    # Fold the attention scale into the q projection; fuse QKV into one matmul.
    w_qkv = jnp.concatenate(
        [params['wq'].astype(f32) * scale, params['wk'].astype(f32),
         params['wv'].astype(f32)], axis=1).astype(bf16)            # (C, 3C)
    b_qkv = jnp.concatenate(
        [params['bq'].astype(f32) * scale, params['bk'].astype(f32),
         params['bv'].astype(f32)], axis=1)                          # (1, 3C)
    wp, w1, w2 = (params[k].astype(bf16) for k in ('wp', 'w1', 'w2'))
    bp, b1, b2 = (params[k].astype(f32) for k in ('bp', 'b1', 'b2'))

    # Generation-aware VMEM budget / tiling (v7x has 64 MiB VMEM per core).
    vmem_cap = _vmem_capacity_bytes()
    vmem_limit = int(min(vmem_cap * 3 // 4, 100 * 1024 * 1024))
    max_tile = 256 if vmem_cap <= 64 * 1024 * 1024 else 512

    tile = _pick_tile(T, max_tile)
    tq = tk = tt = tile
    num_t = T // tt
    num_q = T // tq
    num_kv = T // tk
    assert tq == tk  # causal diagonal / clamp logic assumes square tiles

    # ---------------- kernel 1: LN1 + fused QKV ----------------
    qkv_weights = [ln1_w, ln1_b, w_qkv, b_qkv]
    w_specs1 = [_const_spec(w.shape) for w in qkv_weights]

    ce_qkv = pl.CostEstimate(
        flops=int(2 * B * T * C * 3 * C),
        transcendentals=int(B * T),
        bytes_accessed=int(4 * B * T * C + 3 * 2 * B * T * C + 2 * 3 * C * C))

    q, k, v = pl.pallas_call(
        qkv_kernel,
        out_shape=(jax.ShapeDtypeStruct((B, T, C), bf16),
                   jax.ShapeDtypeStruct((B, T, C), bf16),
                   jax.ShapeDtypeStruct((B, T, C), bf16)),
        grid_spec=pltpu.PrefetchScalarGridSpec(
            num_scalar_prefetch=0,
            grid=(B, num_t),
            in_specs=[pl.BlockSpec((None, tt, C), lambda b, t: (b, t, 0))] + w_specs1,
            out_specs=(pl.BlockSpec((None, tt, C), lambda b, t: (b, t, 0)),
                       pl.BlockSpec((None, tt, C), lambda b, t: (b, t, 0)),
                       pl.BlockSpec((None, tt, C), lambda b, t: (b, t, 0))),
        ),
        compiler_params=pltpu.CompilerParams(
            dimension_semantics=("parallel", "parallel"),
            vmem_limit_bytes=vmem_limit),
        cost_estimate=ce_qkv,
    )(x, *qkv_weights)

    # ------------- kernel 2: flash attention + proj + LN2 + MLP -------------
    mlp_weights = [wp, bp, ln2_w, ln2_b, w1, b1, w2, b2]
    w_specs2 = [_const_spec(w.shape) for w in mlp_weights]

    # K/V DMAs are clamped to the causal boundary: past it the block index
    # repeats, so Pallas skips the copy (and pl.when skips the compute).
    def kv_index_map(b, i, j):
        return (b, jnp.minimum(j, ((i + 1) * tq - 1) // tk), 0)

    ce_attn = pl.CostEstimate(
        flops=int(2 * B * T * T * C + 18 * B * T * C * C),
        transcendentals=int(B * n_head * T * T // 2 + B * T * 4 * C),
        bytes_accessed=int(4 * B * T * C + 2 * B * T * C
                           + (num_q + 1) * 2 * B * T * C      # causal k/v streaming
                           + 2 * (C * C + 8 * C * C)
                           + 4 * B * T * C))

    out = pl.pallas_call(
        functools.partial(attn_mlp_kernel, n_head=n_head, tq=tq, tk=tk),
        out_shape=jax.ShapeDtypeStruct((B, T, C), x.dtype),
        grid_spec=pltpu.PrefetchScalarGridSpec(
            num_scalar_prefetch=0,
            grid=(B, num_q, num_kv),
            in_specs=[pl.BlockSpec((None, tq, C), lambda b, i, j: (b, i, 0)),  # x (residual)
                      pl.BlockSpec((None, tq, C), lambda b, i, j: (b, i, 0)),  # q tile
                      pl.BlockSpec((None, tk, C), kv_index_map),               # k tile
                      pl.BlockSpec((None, tk, C), kv_index_map),               # v tile
                      ] + w_specs2,
            out_specs=pl.BlockSpec((None, tq, C), lambda b, i, j: (b, i, 0)),
            scratch_shapes=[pltpu.VMEM((tq, C), jnp.float32),        # attention accumulator
                            pltpu.VMEM((tq, n_head), jnp.float32),   # running max m
                            pltpu.VMEM((tq, n_head), jnp.float32)],  # running sum l
        ),
        compiler_params=pltpu.CompilerParams(
            dimension_semantics=("parallel", "parallel", "arbitrary"),
            vmem_limit_bytes=vmem_limit),
        cost_estimate=ce_attn,
    )(x, q, k, v, *mlp_weights)

    return out


# --------------------------------------------------------------------------
# Pure-JAX f32 reference (identical math to the PyTorch module, eval mode)
# --------------------------------------------------------------------------
def reference_block(x, params, n_head):
    B, T, C = x.shape
    hd = C // n_head

    def ln(z, w, b):
        mu = jnp.mean(z, axis=-1, keepdims=True)
        var = jnp.mean((z - mu) ** 2, axis=-1, keepdims=True)
        return (z - mu) / jnp.sqrt(var + _EPS) * w + b

    y = ln(x, params['ln1_w'][0], params['ln1_b'][0])
    q = y @ params['wq'] + params['bq'][0]
    k = y @ params['wk'] + params['bk'][0]
    v = y @ params['wv'] + params['bv'][0]
    q = q.reshape(B, T, n_head, hd).transpose(0, 2, 1, 3)
    k = k.reshape(B, T, n_head, hd).transpose(0, 2, 1, 3)
    v = v.reshape(B, T, n_head, hd).transpose(0, 2, 1, 3)
    att = jnp.einsum('bhtd,bhsd->bhts', q, k) / math.sqrt(hd)
    mask = jnp.tril(jnp.ones((T, T), bool))
    att = jnp.where(mask[None, None], att, -jnp.inf)
    att = jax.nn.softmax(att, axis=-1)
    yh = jnp.einsum('bhts,bhsd->bhtd', att, v)
    yh = yh.transpose(0, 2, 1, 3).reshape(B, T, C)
    yh = yh @ params['wp'] + params['bp'][0]
    x1 = x + yh
    z = ln(x1, params['ln2_w'][0], params['ln2_b'][0])
    h = jax.nn.gelu(z @ params['w1'] + params['b1'][0], approximate=False)
    h = h @ params['w2'] + params['b2'][0]
    return x1 + h


if __name__ == "__main__":
    B, T, C, H = 2, 8, 32, 4      # batch, seq, n_embd, n_heads
    key = jax.random.PRNGKey(0)
    ks = jax.random.split(key, 16)
    s = 0.02

    params = {
        'ln1_w': jnp.ones((1, C), jnp.float32),
        'ln1_b': jnp.zeros((1, C), jnp.float32),
        'ln2_w': jnp.ones((1, C), jnp.float32),
        'ln2_b': jnp.zeros((1, C), jnp.float32),
        'wq': s * jax.random.normal(ks[0], (C, C), jnp.float32),
        'bq': s * jax.random.normal(ks[1], (1, C), jnp.float32),
        'wk': s * jax.random.normal(ks[2], (C, C), jnp.float32),
        'bk': s * jax.random.normal(ks[3], (1, C), jnp.float32),
        'wv': s * jax.random.normal(ks[4], (C, C), jnp.float32),
        'bv': s * jax.random.normal(ks[5], (1, C), jnp.float32),
        'wp': s * jax.random.normal(ks[6], (C, C), jnp.float32),
        'bp': s * jax.random.normal(ks[7], (1, C), jnp.float32),
        'w1': s * jax.random.normal(ks[8], (C, 4 * C), jnp.float32),
        'b1': s * jax.random.normal(ks[9], (1, 4 * C), jnp.float32),
        'w2': s * jax.random.normal(ks[10], (4 * C, C), jnp.float32),
        'b2': s * jax.random.normal(ks[11], (1, C), jnp.float32),
    }

    x = jax.random.normal(ks[12], (B, T, C), jnp.float32)

    out = transformer_block(x, params, n_head=H)
    out = jax.block_until_ready(out)

    ref = reference_block(x, params, n_head=H)
    assert out.shape == (B, T, C)
    max_err = jnp.max(jnp.abs(out - ref))
    # bf16 MXU operands (f32 accumulation) -> looser tolerance than a pure-f32 path.
    assert jnp.allclose(out, ref, atol=2e-2, rtol=2e-2), f"max abs err {max_err}"

    print("KERNEL_OK")
</pallas_src>

<mosaic_0001>
module attributes {stable_mosaic.version = 11 : i64} {
  func.func @qkv_kernel(%arg0: i32, %arg1: i32, %arg2: memref<1x8x32xf32, #tpu.memory_space<vmem>>, %arg3: memref<1x32xf32, #tpu.memory_space<vmem>>, %arg4: memref<1x32xf32, #tpu.memory_space<vmem>>, %arg5: memref<32x96xbf16, #tpu.memory_space<vmem>>, %arg6: memref<1x96xf32, #tpu.memory_space<vmem>>, %arg7: memref<1x8x32xbf16, #tpu.memory_space<vmem>>, %arg8: memref<1x8x32xbf16, #tpu.memory_space<vmem>>, %arg9: memref<1x8x32xbf16, #tpu.memory_space<vmem>>) attributes {dimension_semantics = [#tpu.dimension_semantics<parallel>, #tpu.dimension_semantics<parallel>], iteration_bounds = array<i64: 2, 1>, scalar_prefetch = 0 : i64, scratch_operands = 0 : i64, tpu.core_type = #tpu.core_type<tc>, window_params = [{transform_indices = @transform_0, window_bounds = array<i64: 1, 8, 32>}, {pipeline_mode = #tpu.pipeline_mode<synchronous>, transform_indices = @transform_1, window_bounds = array<i64: 1, 32>}, {pipeline_mode = #tpu.pipeline_mode<synchronous>, transform_indices = @transform_2, window_bounds = array<i64: 1, 32>}, {pipeline_mode = #tpu.pipeline_mode<synchronous>, transform_indices = @transform_3, window_bounds = array<i64: 32, 96>}, {pipeline_mode = #tpu.pipeline_mode<synchronous>, transform_indices = @transform_4, window_bounds = array<i64: 1, 96>}, {transform_indices = @transform_5, window_bounds = array<i64: 1, 8, 32>}, {transform_indices = @transform_6, window_bounds = array<i64: 1, 8, 32>}, {transform_indices = @transform_7, window_bounds = array<i64: 1, 8, 32>}]} {
    %c0 = arith.constant 0 : index
    %c0_0 = arith.constant 0 : index
    %c0_1 = arith.constant 0 : index
    %0 = vector.load %arg2[%c0, %c0_0, %c0_1] : memref<1x8x32xf32, #tpu.memory_space<vmem>>, vector<1x8x32xf32>
    %1 = vector.shape_cast %0 : vector<1x8x32xf32> to vector<8x32xf32>
    %c0_2 = arith.constant 0 : index
    %c0_3 = arith.constant 0 : index
    %2 = vector.load %arg3[%c0_2, %c0_3] : memref<1x32xf32, #tpu.memory_space<vmem>>, vector<1x32xf32>
    %c0_4 = arith.constant 0 : index
    %c0_5 = arith.constant 0 : index
    %3 = vector.load %arg4[%c0_4, %c0_5] : memref<1x32xf32, #tpu.memory_space<vmem>>, vector<1x32xf32>
    %cst = arith.constant dense<0.000000e+00> : vector<8xf32>
    %4 = vector.multi_reduction <add>, %1, %cst [1] : vector<8x32xf32> to vector<8xf32>
    %5 = vector.shape_cast %4 : vector<8xf32> to vector<8x1xf32>
    %cst_6 = arith.constant 3.200000e+01 : f32
    %6 = vector.broadcast %cst_6 : f32 to vector<8x1xf32>
    %7 = arith.divf %5, %6 : vector<8x1xf32>
    %8 = vector.broadcast %7 : vector<8x1xf32> to vector<8x32xf32>
    %9 = arith.subf %1, %8 : vector<8x32xf32>
    %10 = arith.mulf %9, %9 : vector<8x32xf32>
    %cst_7 = arith.constant dense<0.000000e+00> : vector<8xf32>
    %11 = vector.multi_reduction <add>, %10, %cst_7 [1] : vector<8x32xf32> to vector<8xf32>
    %12 = vector.shape_cast %11 : vector<8xf32> to vector<8x1xf32>
    %cst_8 = arith.constant 3.200000e+01 : f32
    %13 = vector.broadcast %cst_8 : f32 to vector<8x1xf32>
    %14 = arith.divf %12, %13 : vector<8x1xf32>
    %15 = vector.broadcast %7 : vector<8x1xf32> to vector<8x32xf32>
    %16 = arith.subf %1, %15 : vector<8x32xf32>
    %cst_9 = arith.constant 9.99999974E-6 : f32
    %17 = vector.broadcast %cst_9 : f32 to vector<8x1xf32>
    %18 = arith.addf %14, %17 : vector<8x1xf32>
    %19 = math.rsqrt %18 : vector<8x1xf32>
    %20 = vector.broadcast %19 : vector<8x1xf32> to vector<8x32xf32>
    %21 = arith.mulf %16, %20 : vector<8x32xf32>
    %22 = vector.broadcast %2 : vector<1x32xf32> to vector<8x32xf32>
    %23 = arith.mulf %21, %22 : vector<8x32xf32>
    %24 = vector.broadcast %3 : vector<1x32xf32> to vector<8x32xf32>
    %25 = arith.addf %23, %24 : vector<8x32xf32>
    %26 = arith.truncf %25 : vector<8x32xf32> to vector<8x32xbf16>
    %c0_10 = arith.constant 0 : index
    %c0_11 = arith.constant 0 : index
    %27 = vector.load %arg5[%c0_10, %c0_11] : memref<32x96xbf16, #tpu.memory_space<vmem>>, vector<32x96xbf16>
    %cst_12 = arith.constant dense<0.000000e+00> : vector<8x96xf32>
    %28 = tpu.matmul %26, %27, %cst_12 {dimension_numbers = #tpu.dot_dimension_numbers<[1], [0], [0], [1], [0, 0, 1, 1], [], []>} : vector<8x32xbf16>, vector<32x96xbf16>, vector<8x96xf32> -> vector<8x96xf32>
    %c0_13 = arith.constant 0 : index
    %c0_14 = arith.constant 0 : index
    %29 = vector.load %arg6[%c0_13, %c0_14] : memref<1x96xf32, #tpu.memory_space<vmem>>, vector<1x96xf32>
    %30 = vector.broadcast %29 : vector<1x96xf32> to vector<8x96xf32>
    %31 = arith.addf %28, %30 : vector<8x96xf32>
    %32 = vector.extract_strided_slice %31 {offsets = [0, 0], sizes = [8, 32], strides = [1, 1]} : vector<8x96xf32> to vector<8x32xf32>
    %33 = arith.truncf %32 : vector<8x32xf32> to vector<8x32xbf16>
    %c0_15 = arith.constant 0 : index
    %c0_16 = arith.constant 0 : index
    %c0_17 = arith.constant 0 : index
    %34 = vector.load %arg7[%c0_15, %c0_16, %c0_17] : memref<1x8x32xbf16, #tpu.memory_space<vmem>>, vector<1x8x32xbf16>
    %35 = vector.shape_cast %34 : vector<1x8x32xbf16> to vector<8x32xbf16>
    %36 = vector.shape_cast %33 : vector<8x32xbf16> to vector<1x8x32xbf16>
    tpu.vector_store %arg7[%c0_15, %c0_16, %c0_17], %36 {strides = array<i32>} : memref<1x8x32xbf16, #tpu.memory_space<vmem>>, vector<1x8x32xbf16>,
    %37 = vector.extract_strided_slice %31 {offsets = [0, 32], sizes = [8, 32], strides = [1, 1]} : vector<8x96xf32> to vector<8x32xf32>
    %38 = arith.truncf %37 : vector<8x32xf32> to vector<8x32xbf16>
    %c0_18 = arith.constant 0 : index
    %c0_19 = arith.constant 0 : index
    %c0_20 = arith.constant 0 : index
    %39 = vector.load %arg8[%c0_18, %c0_19, %c0_20] : memref<1x8x32xbf16, #tpu.memory_space<vmem>>, vector<1x8x32xbf16>
    %40 = vector.shape_cast %39 : vector<1x8x32xbf16> to vector<8x32xbf16>
    %41 = vector.shape_cast %38 : vector<8x32xbf16> to vector<1x8x32xbf16>
    tpu.vector_store %arg8[%c0_18, %c0_19, %c0_20], %41 {strides = array<i32>} : memref<1x8x32xbf16, #tpu.memory_space<vmem>>, vector<1x8x32xbf16>,
    %42 = vector.extract_strided_slice %31 {offsets = [0, 64], sizes = [8, 32], strides = [1, 1]} : vector<8x96xf32> to vector<8x32xf32>
    %43 = arith.truncf %42 : vector<8x32xf32> to vector<8x32xbf16>
    %c0_21 = arith.constant 0 : index
    %c0_22 = arith.constant 0 : index
    %c0_23 = arith.constant 0 : index
    %44 = vector.load %arg9[%c0_21, %c0_22, %c0_23] : memref<1x8x32xbf16, #tpu.memory_space<vmem>>, vector<1x8x32xbf16>
    %45 = vector.shape_cast %44 : vector<1x8x32xbf16> to vector<8x32xbf16>
    %46 = vector.shape_cast %43 : vector<8x32xbf16> to vector<1x8x32xbf16>
    tpu.vector_store %arg9[%c0_21, %c0_22, %c0_23], %46 {strides = array<i32>} : memref<1x8x32xbf16, #tpu.memory_space<vmem>>, vector<1x8x32xbf16>,
    return
  }
  func.func @transform_0(%arg0: i32, %arg1: i32) -> (i32, i32, i32) {
    %c0_i32 = arith.constant 0 : i32
    %c0_i32_0 = arith.constant 0 : i32
    return %arg0, %arg1, %c0_i32 : i32, i32, i32
  }
  func.func @transform_1(%arg0: i32, %arg1: i32) -> (i32, i32) {
    %c0_i32 = arith.constant 0 : i32
    %c0_i32_0 = arith.constant 0 : i32
    %c0_i32_1 = arith.constant 0 : i32
    return %c0_i32, %c0_i32_0 : i32, i32
  }
  func.func @transform_2(%arg0: i32, %arg1: i32) -> (i32, i32) {
    %c0_i32 = arith.constant 0 : i32
    %c0_i32_0 = arith.constant 0 : i32
    %c0_i32_1 = arith.constant 0 : i32
    return %c0_i32, %c0_i32_0 : i32, i32
  }
  func.func @transform_3(%arg0: i32, %arg1: i32) -> (i32, i32) {
    %c0_i32 = arith.constant 0 : i32
    %c0_i32_0 = arith.constant 0 : i32
    %c0_i32_1 = arith.constant 0 : i32
    return %c0_i32, %c0_i32_0 : i32, i32
  }
  func.func @transform_4(%arg0: i32, %arg1: i32) -> (i32, i32) {
    %c0_i32 = arith.constant 0 : i32
    %c0_i32_0 = arith.constant 0 : i32
    %c0_i32_1 = arith.constant 0 : i32
    return %c0_i32, %c0_i32_0 : i32, i32
  }
  func.func @transform_5(%arg0: i32, %arg1: i32) -> (i32, i32, i32) {
    %c0_i32 = arith.constant 0 : i32
    %c0_i32_0 = arith.constant 0 : i32
    return %arg0, %arg1, %c0_i32 : i32, i32, i32
  }
  func.func @transform_6(%arg0: i32, %arg1: i32) -> (i32, i32, i32) {
    %c0_i32 = arith.constant 0 : i32
    %c0_i32_0 = arith.constant 0 : i32
    return %arg0, %arg1, %c0_i32 : i32, i32, i32
  }
  func.func @transform_7(%arg0: i32, %arg1: i32) -> (i32, i32, i32) {
    %c0_i32 = arith.constant 0 : i32
    %c0_i32_0 = arith.constant 0 : i32
    return %arg0, %arg1, %c0_i32 : i32, i32, i32
  }
}

</mosaic_0001>

<llo_original>
// kernel: tpu_custom_call.1
$region0: #{tpu_custom_call.1}
  #allocation0 [shape = 'u32[]', space=smem, size = 0x4, offset = 0x4, fixed_abs, tag = 'smem constant byte address 0x4 - core index']
  #allocation1 [shape = 'u32[72,128]{1,0:T(1,128)}', space=vmem, size = 0x9000, scoped, tag = 'internal scratch']
  %s0 = inlined_call_operand.hbm [shape: f32[2,8,32], index: 0, kind: input, shape index: {}]
  %s1 = inlined_call_operand.hbm [shape: f32[1,32], index: 1, kind: input, shape index: {}]
  %s2 = inlined_call_operand.vmem [shape: f32[1,32], index: 2, kind: input, shape index: {}]
  %s3 = inlined_call_operand.hbm [shape: bf16[32,96], index: 3, kind: input, shape index: {}]
  %s4 = inlined_call_operand.vmem [shape: f32[1,96], index: 4, kind: input, shape index: {}]
  %s5 = inlined_call_operand.hbm [shape: bf16[2,8,32], index: 5, kind: output, shape index: {0}]
  %s6 = inlined_call_operand.hbm [shape: bf16[2,8,32], index: 6, kind: output, shape index: {1}]
  %s7 = inlined_call_operand.hbm [shape: bf16[2,8,32], index: 7, kind: output, shape index: {2}]
  %8 = xla_tuple %s5, %s6, %s7
  %s9 = sld [smem:[#allocation0]]
  $region81: #{tpu_custom_call.1} parent=0
    _
  %s11 = ssub.s32 1, %s9
  %s12 = scalar_select 0, %s11, %s9
  $region1: #{tpu_custom_call.1} parent=0
    #allocation2 [shape = 'u8[8192]{0}', space=vmem, size = 0x2000, scoped, tag = 'input window, operand 0']
    #allocation3 [shape = 's32[2]{0}', space=sflag, size = 0x8, scoped, tag = 'scoped memory for tpu_custom_call.1']
    #allocation4 [shape = 's32[2]{0}', space=sflag, size = 0x8, scoped, tag = 'scoped memory for tpu_custom_call.1']
    #allocation5 [shape = 'u8[512]{0}', space=vmem, size = 0x400, scoped, tag = 'input window, operand 1, single buffered']
    #allocation6 [shape = 's32[1]{0}', space=sflag, size = 0x4, scoped, tag = 'scoped memory for tpu_custom_call.1']
    #allocation7 [shape = 'u8[8192]{0}', space=vmem, size = 0x2000, scoped, tag = 'input window, operand 3, single buffered']
    #allocation8 [shape = 'u8[4096]{0}', space=vmem, size = 0x1000, scoped, tag = 'output window, operand 0']
    #allocation9 [shape = 'u8[4096]{0}', space=vmem, size = 0x1000, scoped, tag = 'output window, operand 1']
    #allocation10 [shape = 's32[2]{0}', space=sflag, size = 0x8, scoped, tag = 'scoped memory for tpu_custom_call.1']
    #allocation11 [shape = 'u8[4096]{0}', space=vmem, size = 0x1000, scoped, tag = 'output window, operand 2']
    %13 = vsyncpa [#allocation3], 0
    %s14 = scalar_lea.sflag [#allocation3], 1
    %15 = vsyncpa %s14, 0
    %16 = vsyncpa [#allocation6], 0
    %17 = vsyncpa [#allocation4], 0
    %s18 = scalar_lea.sflag [#allocation4], 1
    %19 = vsyncpa %s18, 0
    %20 = vsyncpa [#allocation10], 0
    %s21 = scalar_lea.sflag [#allocation10], 1
    %22 = vsyncpa %s21, 0
    loop: start=0, step=1, limit=4
    $region2: #{tpu_custom_call.1} parent=1 // loop_pre_header
      _
    $region3: #{tpu_custom_call.1} parent=1 // loop_header
      %s24 = sphi 0, %s28
      %p25 = scmp.ge.s32.totalorder %s24, 4
      %s31 = sphi 0, %s43
      %s32 = sphi 0, %s39
      %s33 = sphi 0, %s31
      %s34 = sphi 0, %s32
      %s35 = sphi 0, %s33
      %s36 = sphi 0, %s34
      %s48 = sphi 0, %s50
      %s51 = sphi 0, %s48
      %s52 = sphi 0, %s51
      %s68 = sphi 0, %s52
      %s72 = sphi 0, %s72
      %s74 = sphi 0, %s72
      %s75 = sphi 0, %s74
      %s89 = sphi 0, %s75
      %s93 = sphi 0, %s93
      %s95 = sphi 0, %s93
      %s96 = sphi 0, %s95
      %s110 = sphi 0, %s96
      %s114 = sphi 0, %s114
      %s116 = sphi 0, %s114
      %s117 = sphi 0, %s116
      %s131 = sphi 0, %s117
      %s135 = sphi 0, %s135
      %s137 = sphi 0, %s135
      %s138 = sphi 0, %s137
      %s152 = sphi 0, %s138
      %s160 = sphi 0, %s162
      %s163 = sphi 0, %s160
      %s164 = sphi 0, %s163
      %s180 = sphi 0, %s164
      %s188 = sphi 0, %s190
      %s191 = sphi 0, %s188
      %s192 = sphi 0, %s191
      %s208 = sphi 0, %s192
      %s216 = sphi 0, %s218
      %s219 = sphi 0, %s216
      %s220 = sphi 0, %s219
      %s236 = sphi 0, %s220
    $region4: #{tpu_custom_call.1} parent=1 // loop_header_branch
      %27 = sbr.rel (%p25) target = $region8
    $region5: #{tpu_custom_call.1} parent=1 // loop_body
      %s29 = ssub.s32 %s24, 1
      %s30 = ssub.s32 %s24, 2
      %s37 = sadd.s32 1, %s32
      %p38 = scmp.ge.s32.totalorder %s37, 1
      %s39 = scalar_select %p38, 0, %s37
      %s40 = sadd.s32 1, %s31
      %s41 = scalar_select %p38, %s40, %s31
      %p42 = scmp.ge.s32.totalorder %s41, 2
      %s43 = scalar_select %p42, 0, %s41
      %s44 = ssub.s32 %s31, %s43
      %s45 = ssub.s32 %s32, %s39
      %s46 = sor.u32 %s44, %s45
      %p47 = scmp.eq.s32.totalorder %s46, 0
      %s49 = sadd.s32 %s48, 1
      %s50 = scalar_select %p47, %s48, %s49
      %p53 = pneg %p47
      %p54 = scmp.eq.s32.totalorder %s24, 1
      %p55 = por %p53, %p54
      %p56 = scmp.ne.s32.totalorder %s48, %s51
      %p57 = scmp.eq.s32.totalorder %s24, 0
      %p58 = por %p56, %p57
      %p59 = scmp.ne.s32.totalorder %s48, %s51
      %p60 = scmp.eq.s32.totalorder %s29, 1
      %p61 = por %p59, %p60
      %p62 = scmp.ne.s32.totalorder %s51, %s52
      %p63 = scmp.eq.s32.totalorder %s29, 0
      %p64 = por %p62, %p63
      %p65 = scmp.ne.s32.totalorder %s51, %s52
      %p66 = scmp.eq.s32.totalorder %s30, 1
      %p67 = por %p65, %p66
      %p69 = scmp.ne.s32.totalorder %s52, %s68
      %p70 = scmp.eq.s32.totalorder %s30, 0
      %p71 = por %p69, %p70
      %s73 = sadd.s32 %s72, 1
      %p76 = scmp.eq.s32.totalorder %s24, 1
      %p77 = scmp.ne.s32.totalorder %s72, %s74
      %p78 = scmp.eq.s32.totalorder %s24, 0
      %p79 = por %p77, %p78
      %p80 = scmp.ne.s32.totalorder %s72, %s74
      %p81 = scmp.eq.s32.totalorder %s29, 1
      %p82 = por %p80, %p81
      %p83 = scmp.ne.s32.totalorder %s74, %s75
      %p84 = scmp.eq.s32.totalorder %s29, 0
      %p85 = por %p83, %p84
      %p86 = scmp.ne.s32.totalorder %s74, %s75
      %p87 = scmp.eq.s32.totalorder %s30, 1
      %p88 = por %p86, %p87
      %p90 = scmp.ne.s32.totalorder %s75, %s89
      %p91 = scmp.eq.s32.totalorder %s30, 0
      %p92 = por %p90, %p91
      %s94 = sadd.s32 %s93, 1
      %p97 = scmp.eq.s32.totalorder %s24, 1
      %p98 = scmp.ne.s32.totalorder %s93, %s95
      %p99 = scmp.eq.s32.totalorder %s24, 0
      %p100 = por %p98, %p99
      %p101 = scmp.ne.s32.totalorder %s93, %s95
      %p102 = scmp.eq.s32.totalorder %s29, 1
      %p103 = por %p101, %p102
      %p104 = scmp.ne.s32.totalorder %s95, %s96
      %p105 = scmp.eq.s32.totalorder %s29, 0
      %p106 = por %p104, %p105
      %p107 = scmp.ne.s32.totalorder %s95, %s96
      %p108 = scmp.eq.s32.totalorder %s30, 1
      %p109 = por %p107, %p108
      %p111 = scmp.ne.s32.totalorder %s96, %s110
      %p112 = scmp.eq.s32.totalorder %s30, 0
      %p113 = por %p111, %p112
      %s115 = sadd.s32 %s114, 1
      %p118 = scmp.eq.s32.totalorder %s24, 1
      %p119 = scmp.ne.s32.totalorder %s114, %s116
      %p120 = scmp.eq.s32.totalorder %s24, 0
      %p121 = por %p119, %p120
      %p122 = scmp.ne.s32.totalorder %s114, %s116
      %p123 = scmp.eq.s32.totalorder %s29, 1
      %p124 = por %p122, %p123
      %p125 = scmp.ne.s32.totalorder %s116, %s117
      %p126 = scmp.eq.s32.totalorder %s29, 0
      %p127 = por %p125, %p126
      %p128 = scmp.ne.s32.totalorder %s116, %s117
      %p129 = scmp.eq.s32.totalorder %s30, 1
      %p130 = por %p128, %p129
      %p132 = scmp.ne.s32.totalorder %s117, %s131
      %p133 = scmp.eq.s32.totalorder %s30, 0
      %p134 = por %p132, %p133
      %s136 = sadd.s32 %s135, 1
      %p139 = scmp.eq.s32.totalorder %s24, 1
      %p140 = scmp.ne.s32.totalorder %s135, %s137
      %p141 = scmp.eq.s32.totalorder %s24, 0
      %p142 = por %p140, %p141
      %p143 = scmp.ne.s32.totalorder %s135, %s137
      %p144 = scmp.eq.s32.totalorder %s29, 1
      %p145 = por %p143, %p144
      %p146 = scmp.ne.s32.totalorder %s137, %s138
      %p147 = scmp.eq.s32.totalorder %s29, 0
      %p148 = por %p146, %p147
      %p149 = scmp.ne.s32.totalorder %s137, %s138
      %p150 = scmp.eq.s32.totalorder %s30, 1
      %p151 = por %p149, %p150
      %p153 = scmp.ne.s32.totalorder %s138, %s152
      %p154 = scmp.eq.s32.totalorder %s30, 0
      %p155 = por %p153, %p154
      %s156 = ssub.s32 %s31, %s43
      %s157 = ssub.s32 %s32, %s39
      %s158 = sor.u32 %s156, %s157
      %p159 = scmp.eq.s32.totalorder %s158, 0
      %s161 = sadd.s32 %s160, 1
      %s162 = scalar_select %p159, %s160, %s161
      %p165 = pneg %p159
      %p166 = scmp.eq.s32.totalorder %s24, 1
      %p167 = por %p165, %p166
      %p168 = scmp.ne.s32.totalorder %s160, %s163
      %p169 = scmp.eq.s32.totalorder %s24, 0
      %p170 = por %p168, %p169
      %p171 = scmp.ne.s32.totalorder %s160, %s163
      %p172 = scmp.eq.s32.totalorder %s29, 1
      %p173 = por %p171, %p172
      %p174 = scmp.ne.s32.totalorder %s163, %s164
      %p175 = scmp.eq.s32.totalorder %s29, 0
      %p176 = por %p174, %p175
      %p177 = scmp.ne.s32.totalorder %s163, %s164
      %p178 = scmp.eq.s32.totalorder %s30, 1
      %p179 = por %p177, %p178
      %p181 = scmp.ne.s32.totalorder %s164, %s180
      %p182 = scmp.eq.s32.totalorder %s30, 0
      %p183 = por %p181, %p182
      %s184 = ssub.s32 %s31, %s43
      %s185 = ssub.s32 %s32, %s39
      %s186 = sor.u32 %s184, %s185
      %p187 = scmp.eq.s32.totalorder %s186, 0
      %s189 = sadd.s32 %s188, 1
      %s190 = scalar_select %p187, %s188, %s189
      %p193 = pneg %p187
      %p194 = scmp.eq.s32.totalorder %s24, 1
      %p195 = por %p193, %p194
      %p196 = scmp.ne.s32.totalorder %s188, %s191
      %p197 = scmp.eq.s32.totalorder %s24, 0
      %p198 = por %p196, %p197
      %p199 = scmp.ne.s32.totalorder %s188, %s191
      %p200 = scmp.eq.s32.totalorder %s29, 1
      %p201 = por %p199, %p200
      %p202 = scmp.ne.s32.totalorder %s191, %s192
      %p203 = scmp.eq.s32.totalorder %s29, 0
      %p204 = por %p202, %p203
      %p205 = scmp.ne.s32.totalorder %s191, %s192
      %p206 = scmp.eq.s32.totalorder %s30, 1
      %p207 = por %p205, %p206
      %p209 = scmp.ne.s32.totalorder %s192, %s208
      %p210 = scmp.eq.s32.totalorder %s30, 0
      %p211 = por %p209, %p210
      %s212 = ssub.s32 %s31, %s43
      %s213 = ssub.s32 %s32, %s39
      %s214 = sor.u32 %s212, %s213
      %p215 = scmp.eq.s32.totalorder %s214, 0
      %s217 = sadd.s32 %s216, 1
      %s218 = scalar_select %p215, %s216, %s217
      %p221 = pneg %p215
      %p222 = scmp.eq.s32.totalorder %s24, 1
      %p223 = por %p221, %p222
      %p224 = scmp.ne.s32.totalorder %s216, %s219
      %p225 = scmp.eq.s32.totalorder %s24, 0
      %p226 = por %p224, %p225
      %p227 = scmp.ne.s32.totalorder %s216, %s219
      %p228 = scmp.eq.s32.totalorder %s29, 1
      %p229 = por %p227, %p228
      %p230 = scmp.ne.s32.totalorder %s219, %s220
      %p231 = scmp.eq.s32.totalorder %s29, 0
      %p232 = por %p230, %p231
      %p233 = scmp.ne.s32.totalorder %s219, %s220
      %p234 = scmp.eq.s32.totalorder %s30, 1
      %p235 = por %p233, %p234
      %p237 = scmp.ne.s32.totalorder %s220, %s236
      %p238 = scmp.eq.s32.totalorder %s30, 0
      %p239 = por %p237, %p238
      %p240 = scmp.le.s32.totalorder 1, %s24
      %p241 = scmp.lt.s32.totalorder %s24, 3
      %p242 = pnand %p240, %p241
      %p243 = pneg %p242
      // Predicated region
      $region9: #{tpu_custom_call.1} parent=5 // pred_check
        _
      $region10: #{tpu_custom_call.1} parent=5 // pred_check_branch
        %245 = sbr.rel (%p242) target = $region12
      $region11: #{tpu_custom_call.1} parent=5 // pred_region
        %s246 = ssub.s32 %s24, 1
        // Predicated region
        $region13: #{tpu_custom_call.1} parent=11 // pred_check
          %p247 = pneg %p85
        $region14: #{tpu_custom_call.1} parent=11 // pred_check_branch
          %249 = sbr.rel (%p247) target = $region16
        $region15: #{tpu_custom_call.1} parent=11 // pred_region
          %251 = vsyncadd [#allocation6], 0
          %s253 = sshll.u32 %s1, 4
          %s254 = int_to_ptr.hbm [resolvable:$true] %s253
          %s255 = sshll.u32 [#allocation5], 4
          %s256 = int_to_ptr.vmem [resolvable:$true] %s255
          %258 = dma.hbm_to_vmem [thread:$0]  %s254, 16, %s256, [#allocation6]
        $region16: #{tpu_custom_call.1} parent=11 // pred_fallthru
          _
        // Predicated region
        $region17: #{tpu_custom_call.1} parent=11 // pred_check
          %p259 = pneg %p106
        $region18: #{tpu_custom_call.1} parent=11 // pred_check_branch
          %261 = sbr.rel (%p259) target = $region20
        $region19: #{tpu_custom_call.1} parent=11 // pred_region
          _
        $region20: #{tpu_custom_call.1} parent=11 // pred_fallthru
          _
        // Predicated region
        $region21: #{tpu_custom_call.1} parent=11 // pred_check
          %p262 = pneg %p127
        $region22: #{tpu_custom_call.1} parent=11 // pred_check_branch
          %264 = sbr.rel (%p262) target = $region24
        $region23: #{tpu_custom_call.1} parent=11 // pred_region
          %266 = vsyncadd [#allocation6], 0
          %s267 = sshll.u32 %s3, 4
          %s268 = int_to_ptr.hbm [resolvable:$true] %s267
          %s269 = sshll.u32 [#allocation7], 4
          %s270 = int_to_ptr.vmem [resolvable:$true] %s269
          %275 = dma.hbm_to_vmem [thread:$0]  %s268, 256, %s270, [#allocation6], 64, 64, 4
        $region24: #{tpu_custom_call.1} parent=11 // pred_fallthru
          _
        // Predicated region
        $region25: #{tpu_custom_call.1} parent=11 // pred_check
          %p276 = pneg %p148
        $region26: #{tpu_custom_call.1} parent=11 // pred_check_branch
          %278 = sbr.rel (%p276) target = $region28
        $region27: #{tpu_custom_call.1} parent=11 // pred_region
          _
        $region28: #{tpu_custom_call.1} parent=11 // pred_fallthru
          _
      $region12: #{tpu_custom_call.1} parent=5 // pred_fallthru
        _
      %p279 = scmp.lt.s32.totalorder %s24, 2
      // Predicated region
      $region29: #{tpu_custom_call.1} parent=5 // pred_check
        %p280 = pneg %p279
      $region30: #{tpu_custom_call.1} parent=5 // pred_check_branch
        %282 = sbr.rel (%p280) target = $region32
      $region31: #{tpu_custom_call.1} parent=5 // pred_region
        // Predicated region
        $region33: #{tpu_custom_call.1} parent=31 // pred_check
          %p283 = pneg %p58
        $region34: #{tpu_custom_call.1} parent=31 // pred_check_branch
          %285 = sbr.rel (%p283) target = $region36
        $region35: #{tpu_custom_call.1} parent=31 // pred_region
          %s286 = sand.u32 %s48, 1
          %s287 = scalar_lea.sflag [#allocation3], %s286
          %s288 = sand.u32 %s48, 1
          %s289 = smul.addr %s288, 8
          %s290 = scalar_lea.vmem [#allocation2], %s289
          %292 = vsyncadd %s287, 0
          %s293 = sadd.s32 %s32, %s31
          %s294 = smul.addr %s293, 8
          %s295 = scalar_lea.hbm %s0, %s294
          %s297 = sshll.u32 %s295, 4
          %s298 = int_to_ptr.hbm [resolvable:$true] %s297
          %s299 = sshll.u32 %s290, 4
          %s300 = int_to_ptr.vmem [resolvable:$true] %s299
          %302 = dma.hbm_to_vmem [thread:$0]  %s298, 128, %s300, %s287
        $region36: #{tpu_custom_call.1} parent=31 // pred_fallthru
          _
      $region32: #{tpu_custom_call.1} parent=5 // pred_fallthru
        _
      %p303 = scmp.le.s32.totalorder 1, %s24
      %p304 = scmp.lt.s32.totalorder %s24, 3
      %p305 = pnand %p303, %p304
      %p306 = pneg %p305
      // Predicated region
      $region37: #{tpu_custom_call.1} parent=5 // pred_check
        _
      $region38: #{tpu_custom_call.1} parent=5 // pred_check_branch
        %308 = sbr.rel (%p305) target = $region40
      $region39: #{tpu_custom_call.1} parent=5 // pred_region
        %s309 = ssub.s32 %s24, 1
        %s310 = sand.u32 %s51, 1
        %s311 = scalar_lea.sflag [#allocation3], %s310
        %s312 = sand.u32 %s51, 1
        %s313 = smul.addr %s312, 8
        %s314 = scalar_lea.vmem [#allocation2], %s313
        // Predicated region
        $region41: #{tpu_custom_call.1} parent=39 // pred_check
          %p315 = pneg %p64
        $region42: #{tpu_custom_call.1} parent=39 // pred_check_branch
          %317 = sbr.rel (%p315) target = $region44
        $region43: #{tpu_custom_call.1} parent=39 // pred_region
          %319 = dma.done %s311, 128
        $region44: #{tpu_custom_call.1} parent=39 // pred_fallthru
          _
        // Predicated region
        $region45: #{tpu_custom_call.1} parent=39 // pred_check
          %p320 = pneg %p85
        $region46: #{tpu_custom_call.1} parent=39 // pred_check_branch
          %322 = sbr.rel (%p320) target = $region48
        $region47: #{tpu_custom_call.1} parent=39 // pred_region
          %324 = dma.done [#allocation6], 16
        $region48: #{tpu_custom_call.1} parent=39 // pred_fallthru
          _
        // Predicated region
        $region49: #{tpu_custom_call.1} parent=39 // pred_check
          %p325 = pneg %p127
        $region50: #{tpu_custom_call.1} parent=39 // pred_check_branch
          %327 = sbr.rel (%p325) target = $region52
        $region51: #{tpu_custom_call.1} parent=39 // pred_region
          %329 = dma.done [#allocation6], 256
        $region52: #{tpu_custom_call.1} parent=39 // pred_fallthru
          _
        %s330 = sand.u32 %s51, 1
        %s331 = scalar_lea.sflag [#allocation3], %s330
        %s332 = sand.u32 %s51, 1
        %s333 = smul.addr %s332, 8
        %s334 = scalar_lea.vmem [#allocation2], %s333
        %p335 = pneg %p64
        %p336 = pneg %p61
        %p337 = pneg %p85
        %p338 = pneg %p82
        %p339 = pneg %p106
        %p340 = pneg %p103
        %p341 = pneg %p127
        %p342 = pneg %p124
        %p343 = pneg %p148
        %p344 = pneg %p145
        %p345 = pneg %p176
        %p346 = pneg %p173
        %s347 = sand.u32 %s163, 1
        %s348 = scalar_lea.sflag [#allocation4], %s347
        %s349 = sand.u32 %s163, 1
        %s350 = smul.addr %s349, 4
        %s351 = scalar_lea.vmem [#allocation8], %s350
        %p352 = pneg %p204
        %p353 = pneg %p201
        %s354 = sand.u32 %s29, 1
        %s355 = scalar_lea.sflag [#allocation10], %s354
        %s356 = sand.u32 %s191, 1
        %s357 = smul.addr %s356, 4
        %s358 = scalar_lea.vmem [#allocation9], %s357
        %p359 = pneg %p232
        %p360 = pneg %p229
        %s361 = sand.u32 %s29, 1
        %s362 = scalar_lea.sflag [#allocation10], %s361
        %s363 = sand.u32 %s219, 1
        %s364 = smul.addr %s363, 4
        %s365 = scalar_lea.vmem [#allocation11], %s364
        %v367 = vld [vmem:[%s314] sm:$0xff]
        %v368 = vld [vmem:[#allocation5] sm:$0x1]
        %v369 = vld [vmem:[%s2] sm:$0x1]
        %vm370 = vcmask 261120
        %v371 = vsel %vm370, %v367, 0.0
        %372 = vadd.xlane.f32.xlu0 %v371
        %v373 = vpop.xlane.xlu0 %372
        %v374 = vrcp.pop 32.0
        %v375 = vmul.f32 32.0, %v374
        %v376 = vsub.f32 1.0, %v375
        %v377 = vmul.f32 %v374, %v376
        %v378 = vadd.f32 %v374, %v377
        %vm379 = vweird.f32 %v374
        %v380 = vsel %vm379, %v374, %v378
        %v381 = vmul.f32 %v373, %v380
        %v382 = vsub.f32 %v367, %v381
        %v383 = vmul.f32 %v382, %v382
        %v384 = vsel %vm370, %v383, 0.0
        %385 = vadd.xlane.f32.xlu0 %v384
        %v386 = vpop.xlane.xlu0 %385
        %v387 = vmul.f32 %v386, %v380
        %v388 = vadd.f32 %v387, 1e-05
        %v389 = vrsqrt.pop %v388
        %v390 = vmul.f32 %v389, %v388
        %v391 = vmul.f32 %v390, %v389
        %v392 = vmul.f32 0.5, %v391
        %v393 = vsub.f32 1.5, %v392
        %v394 = vmul.f32 %v389, %v393
        %vm395 = vweird.f32 %v388
        %vm396 = vweird.f32 %v389
        %vm397 = vmor %vm395, %vm396
        %v398 = vsel %vm397, %v389, %v394
        %v399 = vmul.f32 %v382, %v398
        %v401 = vperm.slane %v368, 0
        %v403 = vmul.f32 %v399, %v401
        %v405 = vperm.slane %v369, 0
        %v407 = vadd.f32 %v403, %v405
        %v408 = vpack.c.bf16 %v407, %v407
        %v409 = vld [vmem:[#allocation7] sm:$0xf]
        %v410 = vld [vmem:[#allocation7 + $0x4] sm:$0xf]
        %v411 = vld [vmem:[#allocation7 + $0x8] sm:$0xf]
        %v412 = vld [vmem:[#allocation7 + $0xc] sm:$0xf]
        %v413 = vld [vmem:[%s4] sm:$0x1]
        %v415 = vperm.slane %v413, 0
        %v421 = vunpack.c.l.b16 %v409
        %v422 = vunpack.c.l.b16 %v410
        %v423 = vunpack.c.l.b16 %v411
        %v424 = vunpack.c.l.b16 %v412
        %v425 = vpack.c.b16 %v422, %v421
        %v426 = vpack.c.b16 %v424, %v423
        %v430 = vsel %vm370, %v408, 0
        %432 = vmatpush.bf16.msra.mxu0 0
        %433 = vmatpush.bf16.msra.mxu0 0
        %434 = vmatpush.bf16.msra.mxu0 0
        %435 = vmatpush.bf16.msra.mxu0 0
        %436 = vmatpush.bf16.msra.mxu0 0
        %437 = vmatpush.bf16.msra.mxu0 0
        %438 = vmatpush.bf16.msra.mxu0 %v426
        %439 = vmatpush.bf16.msra.mxu0 %v425
        %440 = vmatmul.bf16.gmra.mxu0 %v430
        %v441 = vpop.f32.mrf.mxu0
        %v442 = vadd.f32 %v415, %v441
        %v443 = vpop.f32.mrf.mxu0
        %444 = vdwg.mxu0
        %v445 = vpack.c.bf16 %v442, %v442
        %vm446 = vcmask 257024
        %447 = vst.msk [vmem:[%s351] sm:$0xf] %vm446, %v445
        %449 = vrot.lane.b32.xlu0 %v445, 96
        %v450 = vpop.permute.xlu0 %449
        %452 = vst.msk [vmem:[%s358] sm:$0xf] %vm446, %v450
        %453 = vrot.lane.b32.xlu0 %v445, 64
        %v454 = vpop.permute.xlu0 %453
        %456 = vst.msk [vmem:[%s365] sm:$0xf] %vm446, %v454
        %s457 = sand.u32 %s163, 1
        %s458 = scalar_lea.sflag [#allocation4], %s457
        %s459 = sand.u32 %s163, 1
        %s460 = smul.addr %s459, 4
        %s461 = scalar_lea.vmem [#allocation8], %s460
        %s462 = sand.u32 %s29, 1
        %s463 = scalar_lea.sflag [#allocation10], %s462
        %s464 = sand.u32 %s191, 1
        %s465 = smul.addr %s464, 4
        %s466 = scalar_lea.vmem [#allocation9], %s465
        %s467 = sand.u32 %s29, 1
        %s468 = scalar_lea.sflag [#allocation10], %s467
        %s469 = sand.u32 %s219, 1
        %s470 = smul.addr %s469, 4
        %s471 = scalar_lea.vmem [#allocation11], %s470
        // Predicated region
        $region53: #{tpu_custom_call.1} parent=39 // pred_check
          %p472 = pneg %p173
        $region54: #{tpu_custom_call.1} parent=39 // pred_check_branch
          %474 = sbr.rel (%p472) target = $region56
        $region55: #{tpu_custom_call.1} parent=39 // pred_region
          %476 = vsyncadd %s458, 0
          %s477 = sadd.s32 %s34, %s33
          %s478 = smul.addr %s477, 4
          %s479 = scalar_lea.hbm %s5, %s478
          %s481 = sshll.u32 %s461, 4
          %s482 = int_to_ptr.vmem [resolvable:$true] %s481
          %s483 = sshll.u32 %s479, 4
          %s484 = int_to_ptr.hbm [resolvable:$true] %s483
          %486 = dma.vmem_to_hbm [thread:$0]  %s482, 64, %s484, %s458
        $region56: #{tpu_custom_call.1} parent=39 // pred_fallthru
          _
        // Predicated region
        $region57: #{tpu_custom_call.1} parent=39 // pred_check
          %p487 = pneg %p201
        $region58: #{tpu_custom_call.1} parent=39 // pred_check_branch
          %489 = sbr.rel (%p487) target = $region60
        $region59: #{tpu_custom_call.1} parent=39 // pred_region
          %491 = vsyncadd %s463, 0
          %s492 = sadd.s32 %s34, %s33
          %s493 = smul.addr %s492, 4
          %s494 = scalar_lea.hbm %s6, %s493
          %s496 = sshll.u32 %s466, 4
          %s497 = int_to_ptr.vmem [resolvable:$true] %s496
          %s498 = sshll.u32 %s494, 4
          %s499 = int_to_ptr.hbm [resolvable:$true] %s498
          %501 = dma.vmem_to_hbm [thread:$0]  %s497, 64, %s499, %s463
        $region60: #{tpu_custom_call.1} parent=39 // pred_fallthru
          _
        // Predicated region
        $region61: #{tpu_custom_call.1} parent=39 // pred_check
          %p502 = pneg %p229
        $region62: #{tpu_custom_call.1} parent=39 // pred_check_branch
          %504 = sbr.rel (%p502) target = $region64
        $region63: #{tpu_custom_call.1} parent=39 // pred_region
          %506 = vsyncadd %s468, 0
          %s507 = sadd.s32 %s34, %s33
          %s508 = smul.addr %s507, 4
          %s509 = scalar_lea.hbm %s7, %s508
          %s511 = sshll.u32 %s471, 4
          %s512 = int_to_ptr.vmem [resolvable:$true] %s511
          %s513 = sshll.u32 %s509, 4
          %s514 = int_to_ptr.hbm [resolvable:$true] %s513
          %516 = dma.vmem_to_hbm [thread:$0]  %s512, 64, %s514, %s468
        $region64: #{tpu_custom_call.1} parent=39 // pred_fallthru
          _
      $region40: #{tpu_custom_call.1} parent=5 // pred_fallthru
        _
      %p517 = scmp.le.s32.totalorder 2, %s24
      // Predicated region
      $region65: #{tpu_custom_call.1} parent=5 // pred_check
        %p518 = pneg %p517
      $region66: #{tpu_custom_call.1} parent=5 // pred_check_branch
        %520 = sbr.rel (%p518) target = $region68
      $region67: #{tpu_custom_call.1} parent=5 // pred_region
        %s521 = ssub.s32 %s24, 2
        // Predicated region
        $region69: #{tpu_custom_call.1} parent=67 // pred_check
          %p522 = pneg %p179
        $region70: #{tpu_custom_call.1} parent=67 // pred_check_branch
          %524 = sbr.rel (%p522) target = $region72
        $region71: #{tpu_custom_call.1} parent=67 // pred_region
          %s525 = sand.u32 %s164, 1
          %s526 = scalar_lea.sflag [#allocation4], %s525
          %s527 = sand.u32 %s164, 1
          %s528 = smul.addr %s527, 4
          %s529 = scalar_lea.vmem [#allocation8], %s528
          %531 = dma.done %s526, 64
        $region72: #{tpu_custom_call.1} parent=67 // pred_fallthru
          _
        // Predicated region
        $region73: #{tpu_custom_call.1} parent=67 // pred_check
          %p532 = pneg %p207
        $region74: #{tpu_custom_call.1} parent=67 // pred_check_branch
          %534 = sbr.rel (%p532) target = $region76
        $region75: #{tpu_custom_call.1} parent=67 // pred_region
          %s535 = sand.u32 %s30, 1
          %s536 = scalar_lea.sflag [#allocation10], %s535
          %s537 = sand.u32 %s192, 1
          %s538 = smul.addr %s537, 4
          %s539 = scalar_lea.vmem [#allocation9], %s538
          %541 = dma.done %s536, 64
        $region76: #{tpu_custom_call.1} parent=67 // pred_fallthru
          _
        // Predicated region
        $region77: #{tpu_custom_call.1} parent=67 // pred_check
          %p542 = pneg %p235
        $region78: #{tpu_custom_call.1} parent=67 // pred_check_branch
          %544 = sbr.rel (%p542) target = $region80
        $region79: #{tpu_custom_call.1} parent=67 // pred_region
          %s545 = sand.u32 %s30, 1
          %s546 = scalar_lea.sflag [#allocation10], %s545
          %s547 = sand.u32 %s220, 1
          %s548 = smul.addr %s547, 4
          %s549 = scalar_lea.vmem [#allocation11], %s548
          %551 = dma.done %s546, 64
        $region80: #{tpu_custom_call.1} parent=67 // pred_fallthru
          _
      $region68: #{tpu_custom_call.1} parent=5 // pred_fallthru
        _
    $region6: #{tpu_custom_call.1} parent=1 // loop_footer
      %s28 = sadd.s32 1, %s24
    $region7: #{tpu_custom_call.1} parent=1 // loop_footer_branch
      %23 = sbr.rel target = $region3
    $region8: #{tpu_custom_call.1} parent=1 // loop_exit
      _
    %552 = vsyncpa [#allocation3], 1
    %s553 = scalar_lea.sflag [#allocation3], 1
    %554 = vsyncpa %s553, 1
    %555 = vsyncpa [#allocation6], 1
    %556 = vsyncpa [#allocation4], 1
    %s557 = scalar_lea.sflag [#allocation4], 1
    %558 = vsyncpa %s557, 1
    %559 = vsyncpa [#allocation10], 1
    %s560 = scalar_lea.sflag [#allocation10], 1
    %561 = vsyncpa %s560, 1

</llo_original>
